<compile_context>
chip_gen: v7x
topology: tpu7x:2x2x1
jax: 0.10.0
libtpu: 0.0.40
codegen_flags: <defaults>
</compile_context>

<pallas_src>
import math

import jax
import jax.numpy as jnp
from jax.experimental import pallas as pl
from jax.experimental.pallas import tpu as pltpu


# ---------------------------------------------------------------------------
# Helpers.
# ---------------------------------------------------------------------------
def _bytes(shape, dtype):
    return math.prod(shape) * jnp.dtype(dtype).itemsize


def _vmem_limit_bytes(block_bytes, scratch_bytes=0):
    """Scoped-VMEM budget derived from actual buffer sizes.

    Pipelined blocks are double-buffered by the Pallas runtime; scratch is
    single-buffered.  Capped at 56 MiB so it is always safe under v7x's
    64 MiB per-TensorCore VMEM; on v5e/v6e (128 MiB physical) this cap can be
    raised toward ~100 MiB when larger resident weights / tiles justify it.
    """
    need = 2 * block_bytes + scratch_bytes + (4 << 20)
    return int(min(max(need, 32 << 20), 56 << 20))


def _gate_nonlinearities(gates, c):
    """gates: (Bt, 4H) f32 pre-activations, gate order [f, i, o, c_hat]."""
    H = c.shape[-1]
    f = jax.nn.sigmoid(gates[:, 0 * H:1 * H])
    i = jax.nn.sigmoid(gates[:, 1 * H:2 * H])
    o = jax.nn.sigmoid(gates[:, 2 * H:3 * H])
    c_hat = jnp.tanh(gates[:, 3 * H:4 * H])
    new_c = f * c + i * c_hat
    new_h = o * jnp.tanh(new_c)
    return new_h, new_c


# ---------------------------------------------------------------------------
# Single-step cell (matches LSTMCell.forward(x, h, c)).
# ---------------------------------------------------------------------------
def lstm_cell_kernel(x_ref, h_ref, c_ref, wx_ref, wh_ref, b_ref,
                     h_out_ref, c_out_ref):
    gates = (
        jnp.dot(x_ref[...].astype(wx_ref.dtype), wx_ref[...],
                preferred_element_type=jnp.float32)
        + jnp.dot(h_ref[...].astype(wh_ref.dtype), wh_ref[...],
                  preferred_element_type=jnp.float32)
        + b_ref[...].astype(jnp.float32)
    )  # (Bt, 4H) f32
    new_h, new_c = _gate_nonlinearities(gates, c_ref[...].astype(jnp.float32))
    h_out_ref[...] = new_h.astype(h_out_ref.dtype)
    c_out_ref[...] = new_c.astype(c_out_ref.dtype)


def lstm_cell(x, h, c, params, *, batch_tile=256):
    """One LSTMCell.forward step.  params = (Wx (E,4H), Wh (H,4H), b (1,4H))."""
    wx, wh, b = params
    B, E = x.shape
    H = h.shape[-1]
    # MXU has 256 rows on v6e/v7x: keep M-tiles >= 256 when possible, else run
    # the whole batch as a single tile (no grid).
    if batch_tile is None or B < batch_tile or B % batch_tile != 0:
        batch_tile = B
    grid = (B // batch_tile,)

    block_bytes = (
        _bytes((batch_tile, E), x.dtype)
        + 2 * _bytes((batch_tile, H), x.dtype)        # h, c in
        + _bytes((E, 4 * H), wx.dtype)
        + _bytes((H, 4 * H), wh.dtype)
        + _bytes((1, 4 * H), b.dtype)
        + 2 * _bytes((batch_tile, H), x.dtype)        # h, c out
    )

    new_h, new_c = pl.pallas_call(
        lstm_cell_kernel,
        out_shape=(jax.ShapeDtypeStruct((B, H), x.dtype),
                   jax.ShapeDtypeStruct((B, H), x.dtype)),
        grid=grid,
        in_specs=[
            pl.BlockSpec((batch_tile, E), lambda i: (i, 0)),   # x tile
            pl.BlockSpec((batch_tile, H), lambda i: (i, 0)),   # h tile
            pl.BlockSpec((batch_tile, H), lambda i: (i, 0)),   # c tile
            pl.BlockSpec((E, 4 * H), lambda i: (0, 0)),        # Wx (resident)
            pl.BlockSpec((H, 4 * H), lambda i: (0, 0)),        # Wh (resident)
            pl.BlockSpec((1, 4 * H), lambda i: (0, 0)),        # b  (resident)
        ],
        out_specs=(
            pl.BlockSpec((batch_tile, H), lambda i: (i, 0)),
            pl.BlockSpec((batch_tile, H), lambda i: (i, 0)),
        ),
        compiler_params=pltpu.CompilerParams(
            dimension_semantics=("parallel",),   # batch tiles shard on v7x's 2 TCs
            vmem_limit_bytes=_vmem_limit_bytes(block_bytes),
        ),
    )(x, h, c, wx, wh, b)
    return new_h, new_c


# ---------------------------------------------------------------------------
# Phase 1 of the scan: hoisted input projection  gates_x = x @ Wx + b
# (one big matmul with M = T*B rows, off the recurrent critical path).
# ---------------------------------------------------------------------------
def _proj_kernel(x_ref, wx_ref, b_ref, gx_ref):
    gx_ref[...] = (
        jnp.dot(x_ref[...].astype(wx_ref.dtype), wx_ref[...],
                preferred_element_type=jnp.float32)
        + b_ref[...].astype(jnp.float32)
    ).astype(gx_ref.dtype)


def _input_projection(x_flat, wx, b, *, m_tile=512, out_dtype=jnp.float32):
    M, E = x_flat.shape
    N = wx.shape[-1]
    if M < m_tile or M % m_tile != 0:
        m_tile = M
    grid = (M // m_tile,)
    block_bytes = (_bytes((m_tile, E), x_flat.dtype)
                   + _bytes((E, N), wx.dtype)
                   + _bytes((1, N), b.dtype)
                   + _bytes((m_tile, N), out_dtype))
    return pl.pallas_call(
        _proj_kernel,
        out_shape=jax.ShapeDtypeStruct((M, N), out_dtype),
        grid=grid,
        in_specs=[
            pl.BlockSpec((m_tile, E), lambda i: (i, 0)),
            pl.BlockSpec((E, N), lambda i: (0, 0)),     # Wx (resident)
            pl.BlockSpec((1, N), lambda i: (0, 0)),     # b  (resident)
        ],
        out_specs=pl.BlockSpec((m_tile, N), lambda i: (i, 0)),
        compiler_params=pltpu.CompilerParams(
            dimension_semantics=("parallel",),
            vmem_limit_bytes=_vmem_limit_bytes(block_bytes),
        ),
    )(x_flat, wx, b)


# ---------------------------------------------------------------------------
# Phase 2: weight-stationary recurrence.  Grid = (batch_tiles, time_blocks);
# T_BLOCK steps per grid iteration, h/c carried in registers inside the block
# and in VMEM scratch across blocks; Wh loaded once and resident.
# ---------------------------------------------------------------------------
def lstm_scan_kernel(gx_ref, h0_ref, c0_ref, wh_ref,
                     h_seq_ref, c_last_ref, h_st, c_st):
    ti = pl.program_id(1)

    @pl.when(ti == 0)
    def _():
        h_st[...] = h0_ref[...].astype(jnp.float32)
        c_st[...] = c0_ref[...].astype(jnp.float32)

    t_block = gx_ref.shape[0]
    wh = wh_ref[...]                     # hoisted: read once per grid step

    def step(t, carry):
        h, c = carry
        # Only the recurrent projection h @ Wh is on the serial path; the x
        # projection and bias were precomputed into gates_x.
        gates = gx_ref[t] + jnp.dot(h.astype(wh.dtype), wh,
                                    preferred_element_type=jnp.float32)
        new_h, new_c = _gate_nonlinearities(gates, c)
        h_seq_ref[t] = new_h.astype(h_seq_ref.dtype)
        return new_h, new_c

    h, c = jax.lax.fori_loop(0, t_block, step, (h_st[...], c_st[...]),
                             unroll=True)
    h_st[...] = h
    c_st[...] = c

    # Only the final cell state is written back (review: halves output bytes).
    @pl.when(ti == pl.num_programs(1) - 1)
    def _():
        c_last_ref[...] = c.astype(c_last_ref.dtype)


def lstm_scan(x_seq, h0, c0, params, *, t_block=4, batch_tile=None):
    """Runs the LSTM cell over x_seq (T, B, E).

    Returns (h_seq: (T, B, H), c_last: (B, H)).  Per-step cell states are not
    streamed out; only the final c is (same h_seq semantics as before).
    """
    wx, wh, b = params
    T, B, E = x_seq.shape
    H = h0.shape[-1]

    # gates_x kept in f32 so the recurrent accumulation matches the reference.
    gates_x = _input_projection(x_seq.reshape(T * B, E), wx, b,
                                out_dtype=jnp.float32)
    gates_x = gates_x.reshape(T, B, 4 * H)

    if t_block is None or T < t_block or T % t_block != 0:
        t_block = T
    if batch_tile is None or B < batch_tile or B % batch_tile != 0:
        batch_tile = B
    grid = (B // batch_tile, T // t_block)   # (parallel batch, sequential time)

    block_bytes = (
        _bytes((t_block, batch_tile, 4 * H), jnp.float32)     # gates_x tile
        + 2 * _bytes((batch_tile, H), h0.dtype)               # h0, c0
        + _bytes((H, 4 * H), wh.dtype)                        # Wh (resident)
        + _bytes((t_block, batch_tile, H), x_seq.dtype)       # h_seq tile
        + _bytes((batch_tile, H), x_seq.dtype)                # c_last
    )
    scratch_bytes = 2 * _bytes((batch_tile, H), jnp.float32)

    h_seq, c_last = pl.pallas_call(
        lstm_scan_kernel,
        out_shape=(jax.ShapeDtypeStruct((T, B, H), x_seq.dtype),
                   jax.ShapeDtypeStruct((B, H), x_seq.dtype)),
        grid=grid,
        in_specs=[
            pl.BlockSpec((t_block, batch_tile, 4 * H),
                         lambda bi, ti: (ti, bi, 0)),          # gates_x stream
            pl.BlockSpec((batch_tile, H), lambda bi, ti: (bi, 0)),   # h0
            pl.BlockSpec((batch_tile, H), lambda bi, ti: (bi, 0)),   # c0
            pl.BlockSpec((H, 4 * H), lambda bi, ti: (0, 0)),         # Wh resident
        ],
        out_specs=(
            pl.BlockSpec((t_block, batch_tile, H), lambda bi, ti: (ti, bi, 0)),
            pl.BlockSpec((batch_tile, H), lambda bi, ti: (bi, 0)),
        ),
        scratch_shapes=[
            pltpu.VMEM((batch_tile, H), jnp.float32),   # running h
            pltpu.VMEM((batch_tile, H), jnp.float32),   # running c
        ],
        compiler_params=pltpu.CompilerParams(
            dimension_semantics=("parallel", "arbitrary"),
            vmem_limit_bytes=_vmem_limit_bytes(block_bytes, scratch_bytes),
        ),
    )(gates_x, h0, c0, wh)
    return h_seq, c_last


# ---------------------------------------------------------------------------
# Parameters & pure-JAX references.
# ---------------------------------------------------------------------------
def init_params(key, d_embed, d_hidden, dtype=jnp.bfloat16):
    """Fused-gate params; gate order along 4H is [f, i, o, c_hat] (Wf, Wi, Wo, U).

    Init mirrors nn.Linear default U(-k, k), k = 1/sqrt(d_embed + d_hidden).
    Wx rows = the `x` part of torch.cat([x, h]), Wh rows = the `h` part, so
    x @ Wx + h @ Wh == cat([x, h]) @ W.  Keep d_hidden a multiple of 128 for
    lane-aligned gate slices (perf, not correctness).
    """
    d_in = d_embed + d_hidden
    k = 1.0 / float(d_in) ** 0.5
    kw, kb = jax.random.split(key)
    w = jax.random.uniform(kw, (d_in, 4 * d_hidden), jnp.float32, -k, k)
    b = jax.random.uniform(kb, (1, 4 * d_hidden), jnp.float32, -k, k)
    return (w[:d_embed].astype(dtype), w[d_embed:].astype(dtype), b.astype(dtype))


def lstm_cell_ref(x, h, c, params):
    wx, wh, b = params
    cd = wx.dtype
    H = c.shape[-1]
    gates = (jnp.dot(x.astype(cd), wx, preferred_element_type=jnp.float32)
             + jnp.dot(h.astype(cd), wh, preferred_element_type=jnp.float32)
             + b.astype(jnp.float32))
    f = jax.nn.sigmoid(gates[:, 0 * H:1 * H])
    i = jax.nn.sigmoid(gates[:, 1 * H:2 * H])
    o = jax.nn.sigmoid(gates[:, 2 * H:3 * H])
    c_hat = jnp.tanh(gates[:, 3 * H:4 * H])
    new_c = f * c.astype(jnp.float32) + i * c_hat
    new_h = o * jnp.tanh(new_c)
    return new_h.astype(x.dtype), new_c.astype(x.dtype)


def lstm_scan_ref(x_seq, h0, c0, params):
    def step(carry, x_t):
        h, c = carry
        nh, nc = lstm_cell_ref(x_t, h, c, params)
        return (nh, nc), (nh, nc)
    _, (hs, cs) = jax.lax.scan(step, (h0, c0), x_seq)
    return hs, cs


# ---------------------------------------------------------------------------
if __name__ == "__main__":
    B, T, d_embed, d_hidden = 32, 8, 64, 128
    key = jax.random.PRNGKey(0)
    kx, kh, kc, kp, ks = jax.random.split(key, 5)

    params = init_params(kp, d_embed, d_hidden, dtype=jnp.bfloat16)

    # --- single-step cell (LSTMCell.forward semantics) ---
    x = jax.random.normal(kx, (B, d_embed), jnp.float32)
    h = jax.random.normal(kh, (B, d_hidden), jnp.float32)
    c = jax.random.normal(kc, (B, d_hidden), jnp.float32)

    new_h, new_c = jax.jit(lstm_cell)(x, h, c, params)
    jax.block_until_ready((new_h, new_c))

    ref_h, ref_c = lstm_cell_ref(x, h, c, params)
    assert jnp.allclose(new_h, ref_h, atol=1e-2, rtol=1e-2)
    assert jnp.allclose(new_c, ref_c, atol=1e-2, rtol=1e-2)

    # --- weight-stationary multi-step scan (hoisted x-projection + blocked T) ---
    x_seq = jax.random.normal(ks, (T, B, d_embed), jnp.float32)
    h_seq, c_last = jax.jit(lstm_scan)(x_seq, h, c, params)
    jax.block_until_ready((h_seq, c_last))

    ref_hs, ref_cs = lstm_scan_ref(x_seq, h, c, params)
    assert jnp.allclose(h_seq, ref_hs, atol=2e-2, rtol=2e-2)
    assert jnp.allclose(c_last, ref_cs[-1], atol=2e-2, rtol=2e-2)

    print("KERNEL_OK")
</pallas_src>

<mosaic_0001>
module attributes {stable_mosaic.version = 11 : i64} {
  func.func @lstm_cell_kernel(%arg0: i32, %arg1: memref<32x64xf32, #tpu.memory_space<vmem>>, %arg2: memref<32x128xf32, #tpu.memory_space<vmem>>, %arg3: memref<32x128xf32, #tpu.memory_space<vmem>>, %arg4: memref<64x512xbf16, #tpu.memory_space<vmem>>, %arg5: memref<128x512xbf16, #tpu.memory_space<vmem>>, %arg6: memref<1x512xbf16, #tpu.memory_space<vmem>>, %arg7: memref<32x128xf32, #tpu.memory_space<vmem>>, %arg8: memref<32x128xf32, #tpu.memory_space<vmem>>) attributes {dimension_semantics = [#tpu.dimension_semantics<parallel>], iteration_bounds = array<i64: 1>, scalar_prefetch = 0 : i64, scratch_operands = 0 : i64, tpu.core_type = #tpu.core_type<tc>, window_params = [{transform_indices = @transform_0, window_bounds = array<i64: 32, 64>}, {transform_indices = @transform_1, window_bounds = array<i64: 32, 128>}, {transform_indices = @transform_2, window_bounds = array<i64: 32, 128>}, {pipeline_mode = #tpu.pipeline_mode<synchronous>, transform_indices = @transform_3, window_bounds = array<i64: 64, 512>}, {pipeline_mode = #tpu.pipeline_mode<synchronous>, transform_indices = @transform_4, window_bounds = array<i64: 128, 512>}, {pipeline_mode = #tpu.pipeline_mode<synchronous>, transform_indices = @transform_5, window_bounds = array<i64: 1, 512>}, {transform_indices = @transform_6, window_bounds = array<i64: 32, 128>}, {transform_indices = @transform_7, window_bounds = array<i64: 32, 128>}]} {
    %c0 = arith.constant 0 : index
    %c0_0 = arith.constant 0 : index
    %0 = vector.load %arg1[%c0, %c0_0] : memref<32x64xf32, #tpu.memory_space<vmem>>, vector<32x64xf32>
    %1 = arith.truncf %0 : vector<32x64xf32> to vector<32x64xbf16>
    %c0_1 = arith.constant 0 : index
    %c0_2 = arith.constant 0 : index
    %2 = vector.load %arg4[%c0_1, %c0_2] : memref<64x512xbf16, #tpu.memory_space<vmem>>, vector<64x512xbf16>
    %cst = arith.constant dense<0.000000e+00> : vector<32x512xf32>
    %3 = tpu.matmul %1, %2, %cst {dimension_numbers = #tpu.dot_dimension_numbers<[1], [0], [0], [1], [0, 0, 1, 1], [], []>} : vector<32x64xbf16>, vector<64x512xbf16>, vector<32x512xf32> -> vector<32x512xf32>
    %c0_3 = arith.constant 0 : index
    %c0_4 = arith.constant 0 : index
    %4 = vector.load %arg2[%c0_3, %c0_4] : memref<32x128xf32, #tpu.memory_space<vmem>>, vector<32x128xf32>
    %5 = arith.truncf %4 : vector<32x128xf32> to vector<32x128xbf16>
    %c0_5 = arith.constant 0 : index
    %c0_6 = arith.constant 0 : index
    %6 = vector.load %arg5[%c0_5, %c0_6] : memref<128x512xbf16, #tpu.memory_space<vmem>>, vector<128x512xbf16>
    %cst_7 = arith.constant dense<0.000000e+00> : vector<32x512xf32>
    %7 = tpu.matmul %5, %6, %cst_7 {dimension_numbers = #tpu.dot_dimension_numbers<[1], [0], [0], [1], [0, 0, 1, 1], [], []>} : vector<32x128xbf16>, vector<128x512xbf16>, vector<32x512xf32> -> vector<32x512xf32>
    %8 = arith.addf %3, %7 : vector<32x512xf32>
    %c0_8 = arith.constant 0 : index
    %c0_9 = arith.constant 0 : index
    %9 = vector.load %arg6[%c0_8, %c0_9] : memref<1x512xbf16, #tpu.memory_space<vmem>>, vector<1x512xbf16>
    %10 = arith.extf %9 : vector<1x512xbf16> to vector<1x512xf32>
    %11 = vector.broadcast %10 : vector<1x512xf32> to vector<32x512xf32>
    %12 = arith.addf %8, %11 : vector<32x512xf32>
    %c0_10 = arith.constant 0 : index
    %c0_11 = arith.constant 0 : index
    %13 = vector.load %arg3[%c0_10, %c0_11] : memref<32x128xf32, #tpu.memory_space<vmem>>, vector<32x128xf32>
    %14 = vector.extract_strided_slice %12 {offsets = [0, 0], sizes = [32, 128], strides = [1, 1]} : vector<32x512xf32> to vector<32x128xf32>
    %15 = arith.negf %14 : vector<32x128xf32>
    %16 = math.exp %15 : vector<32x128xf32>
    %cst_12 = arith.constant 1.000000e+00 : f32
    %17 = vector.broadcast %cst_12 : f32 to vector<32x128xf32>
    %18 = arith.addf %17, %16 : vector<32x128xf32>
    %19 = arith.divf %17, %18 : vector<32x128xf32>
    %20 = vector.extract_strided_slice %12 {offsets = [0, 128], sizes = [32, 128], strides = [1, 1]} : vector<32x512xf32> to vector<32x128xf32>
    %21 = arith.negf %20 : vector<32x128xf32>
    %22 = math.exp %21 : vector<32x128xf32>
    %cst_13 = arith.constant 1.000000e+00 : f32
    %23 = vector.broadcast %cst_13 : f32 to vector<32x128xf32>
    %24 = arith.addf %23, %22 : vector<32x128xf32>
    %25 = arith.divf %23, %24 : vector<32x128xf32>
    %26 = vector.extract_strided_slice %12 {offsets = [0, 256], sizes = [32, 128], strides = [1, 1]} : vector<32x512xf32> to vector<32x128xf32>
    %27 = arith.negf %26 : vector<32x128xf32>
    %28 = math.exp %27 : vector<32x128xf32>
    %cst_14 = arith.constant 1.000000e+00 : f32
    %29 = vector.broadcast %cst_14 : f32 to vector<32x128xf32>
    %30 = arith.addf %29, %28 : vector<32x128xf32>
    %31 = arith.divf %29, %30 : vector<32x128xf32>
    %32 = vector.extract_strided_slice %12 {offsets = [0, 384], sizes = [32, 128], strides = [1, 1]} : vector<32x512xf32> to vector<32x128xf32>
    %33 = math.tanh %32 : vector<32x128xf32>
    %34 = arith.mulf %19, %13 : vector<32x128xf32>
    %35 = arith.mulf %25, %33 : vector<32x128xf32>
    %36 = arith.addf %34, %35 : vector<32x128xf32>
    %37 = math.tanh %36 : vector<32x128xf32>
    %38 = arith.mulf %31, %37 : vector<32x128xf32>
    %c0_15 = arith.constant 0 : index
    %c0_16 = arith.constant 0 : index
    %39 = vector.load %arg7[%c0_15, %c0_16] : memref<32x128xf32, #tpu.memory_space<vmem>>, vector<32x128xf32>
    tpu.vector_store %arg7[%c0_15, %c0_16], %38 {strides = array<i32>} : memref<32x128xf32, #tpu.memory_space<vmem>>, vector<32x128xf32>,
    %c0_17 = arith.constant 0 : index
    %c0_18 = arith.constant 0 : index
    %40 = vector.load %arg8[%c0_17, %c0_18] : memref<32x128xf32, #tpu.memory_space<vmem>>, vector<32x128xf32>
    tpu.vector_store %arg8[%c0_17, %c0_18], %36 {strides = array<i32>} : memref<32x128xf32, #tpu.memory_space<vmem>>, vector<32x128xf32>,
    return
  }
  func.func @transform_0(%arg0: i32) -> (i32, i32) {
    %c0_i32 = arith.constant 0 : i32
    %c0_i32_0 = arith.constant 0 : i32
    return %arg0, %c0_i32 : i32, i32
  }
  func.func @transform_1(%arg0: i32) -> (i32, i32) {
    %c0_i32 = arith.constant 0 : i32
    %c0_i32_0 = arith.constant 0 : i32
    return %arg0, %c0_i32 : i32, i32
  }
  func.func @transform_2(%arg0: i32) -> (i32, i32) {
    %c0_i32 = arith.constant 0 : i32
    %c0_i32_0 = arith.constant 0 : i32
    return %arg0, %c0_i32 : i32, i32
  }
  func.func @transform_3(%arg0: i32) -> (i32, i32) {
    %c0_i32 = arith.constant 0 : i32
    %c0_i32_0 = arith.constant 0 : i32
    %c0_i32_1 = arith.constant 0 : i32
    return %c0_i32, %c0_i32_0 : i32, i32
  }
  func.func @transform_4(%arg0: i32) -> (i32, i32) {
    %c0_i32 = arith.constant 0 : i32
    %c0_i32_0 = arith.constant 0 : i32
    %c0_i32_1 = arith.constant 0 : i32
    return %c0_i32, %c0_i32_0 : i32, i32
  }
  func.func @transform_5(%arg0: i32) -> (i32, i32) {
    %c0_i32 = arith.constant 0 : i32
    %c0_i32_0 = arith.constant 0 : i32
    %c0_i32_1 = arith.constant 0 : i32
    return %c0_i32, %c0_i32_0 : i32, i32
  }
  func.func @transform_6(%arg0: i32) -> (i32, i32) {
    %c0_i32 = arith.constant 0 : i32
    %c0_i32_0 = arith.constant 0 : i32
    return %arg0, %c0_i32 : i32, i32
  }
  func.func @transform_7(%arg0: i32) -> (i32, i32) {
    %c0_i32 = arith.constant 0 : i32
    %c0_i32_0 = arith.constant 0 : i32
    return %arg0, %c0_i32 : i32, i32
  }
}

</mosaic_0001>

<llo_original>
// kernel: lstm_cell.1
$region0: #{lstm_cell.1}
  #allocation0 [shape = 'u32[]', space=smem, size = 0x4, offset = 0x4, fixed_abs, tag = 'smem constant byte address 0x4 - core index']
  #allocation1 [shape = 'u32[144,128]{1,0:T(1,128)}', space=vmem, size = 0x12000, scoped, tag = 'internal scratch']
  %s0 = inlined_call_operand.hbm [shape: f32[32,64], index: 0, kind: input, shape index: {}]
  %s1 = inlined_call_operand.hbm [shape: f32[32,128], index: 1, kind: input, shape index: {}]
  %s2 = inlined_call_operand.hbm [shape: f32[32,128], index: 2, kind: input, shape index: {}]
  %s3 = inlined_call_operand.hbm [shape: bf16[64,512], index: 3, kind: input, shape index: {}]
  %s4 = inlined_call_operand.hbm [shape: bf16[128,512], index: 4, kind: input, shape index: {}]
  %s5 = inlined_call_operand.vmem [shape: bf16[1,512], index: 5, kind: input, shape index: {}]
  %s6 = inlined_call_operand.hbm [shape: f32[32,128], index: 6, kind: output, shape index: {0}]
  %s7 = inlined_call_operand.hbm [shape: f32[32,128], index: 7, kind: output, shape index: {1}]
  %8 = xla_tuple %s6, %s7
  %s9 = sld [smem:[#allocation0]]
  $region62: #{lstm_cell.1} parent=0
    _
  %s11 = ssub.s32 1, %s9
  %s12 = scalar_select 0, %s11, %s9
  $region1: #{lstm_cell.1} parent=0
    #allocation2 [shape = 'u8[16384]{0}', space=vmem, size = 0x4000, scoped, tag = 'input window, operand 0, single buffered']
    #allocation3 [shape = 's32[1]{0}', space=sflag, size = 0x4, scoped, tag = 'scoped memory for lstm_cell.1']
    #allocation4 [shape = 's32[1]{0}', space=sflag, size = 0x4, scoped, tag = 'scoped memory for lstm_cell.1']
    #allocation5 [shape = 'u8[16384]{0}', space=vmem, size = 0x4000, scoped, tag = 'input window, operand 1, single buffered']
    #allocation6 [shape = 's32[1]{0}', space=sflag, size = 0x4, scoped, tag = 'scoped memory for lstm_cell.1']
    #allocation7 [shape = 'u8[16384]{0}', space=vmem, size = 0x4000, scoped, tag = 'input window, operand 2, single buffered']
    #allocation8 [shape = 'u8[65536]{0}', space=vmem, size = 0x10000, scoped, tag = 'input window, operand 3, single buffered']
    #allocation9 [shape = 's32[1]{0}', space=sflag, size = 0x4, scoped, tag = 'scoped memory for lstm_cell.1']
    #allocation10 [shape = 'u8[131072]{0}', space=vmem, size = 0x20000, scoped, tag = 'input window, operand 4, single buffered']
    #allocation11 [shape = 'u8[16384]{0}', space=vmem, size = 0x4000, scoped, tag = 'output window, operand 0, single buffered']
    #allocation12 [shape = 'u8[16384]{0}', space=vmem, size = 0x4000, scoped, tag = 'output window, operand 1, single buffered']
    #allocation13 [shape = 's32[1]{0}', space=sflag, size = 0x4, scoped, tag = 'scoped memory for lstm_cell.1']
    %13 = vsyncpa [#allocation3], 0
    %14 = vsyncpa [#allocation6], 0
    %15 = vsyncpa [#allocation9], 0
    %16 = vsyncpa [#allocation4], 0
    %17 = vsyncpa [#allocation13], 0
    // Predicated region
    $region2: #{lstm_cell.1} parent=1 // pred_check
      _
    $region3: #{lstm_cell.1} parent=1 // pred_check_branch
      %19 = sbr.rel (0) target = $region5
    $region4: #{lstm_cell.1} parent=1 // pred_region
      %s21 = ssub.s32 512, 512
      %22 = vsyncadd [#allocation3], %s21
      %s23 = sshll.u32 [#allocation2], 4
      %s24 = int_to_ptr.vmem [resolvable:$true] %s23
      %29 = dma.hbm_to_vmem [thread:$0]  %s0, 512, %s24, [#allocation3], 128, 128, 8
    $region5: #{lstm_cell.1} parent=1 // pred_fallthru
      _
    // Predicated region
    $region6: #{lstm_cell.1} parent=1 // pred_check
      _
    $region7: #{lstm_cell.1} parent=1 // pred_check_branch
      %31 = sbr.rel (0) target = $region9
    $region8: #{lstm_cell.1} parent=1 // pred_region
      %s33 = ssub.s32 512, 512
      %34 = vsyncadd [#allocation6], %s33
      %s35 = sshll.u32 [#allocation5], 4
      %s36 = int_to_ptr.vmem [resolvable:$true] %s35
      %41 = dma.hbm_to_vmem [thread:$0]  %s1, 512, %s36, [#allocation6], 128, 128, 8
    $region9: #{lstm_cell.1} parent=1 // pred_fallthru
      _
    // Predicated region
    $region10: #{lstm_cell.1} parent=1 // pred_check
      _
    $region11: #{lstm_cell.1} parent=1 // pred_check_branch
      %43 = sbr.rel (0) target = $region13
    $region12: #{lstm_cell.1} parent=1 // pred_region
      %s45 = ssub.s32 512, 512
      %46 = vsyncadd [#allocation6], %s45
      %s47 = sshll.u32 [#allocation7], 4
      %s48 = int_to_ptr.vmem [resolvable:$true] %s47
      %53 = dma.hbm_to_vmem [thread:$0]  %s2, 512, %s48, [#allocation6], 128, 128, 8
    $region13: #{lstm_cell.1} parent=1 // pred_fallthru
      _
    // Predicated region
    $region14: #{lstm_cell.1} parent=1 // pred_check
      _
    $region15: #{lstm_cell.1} parent=1 // pred_check_branch
      %55 = sbr.rel (0) target = $region17
    $region16: #{lstm_cell.1} parent=1 // pred_region
      %s57 = ssub.s32 2048, 2048
      %58 = vsyncadd [#allocation9], %s57
      %s59 = sshll.u32 [#allocation8], 4
      %s60 = int_to_ptr.vmem [resolvable:$true] %s59
      %65 = dma.hbm_to_vmem [thread:$0]  %s3, 2048, %s60, [#allocation9], 256, 256, 16
    $region17: #{lstm_cell.1} parent=1 // pred_fallthru
      _
    // Predicated region
    $region18: #{lstm_cell.1} parent=1 // pred_check
      _
    $region19: #{lstm_cell.1} parent=1 // pred_check_branch
      %67 = sbr.rel (0) target = $region21
    $region20: #{lstm_cell.1} parent=1 // pred_region
      %s69 = ssub.s32 4096, 4096
      %70 = vsyncadd [#allocation9], %s69
      %s71 = sshll.u32 [#allocation10], 4
      %s72 = int_to_ptr.vmem [resolvable:$true] %s71
      %77 = dma.hbm_to_vmem [thread:$0]  %s4, 4096, %s72, [#allocation9], 256, 256, 16
    $region21: #{lstm_cell.1} parent=1 // pred_fallthru
      _
    // Predicated region
    $region22: #{lstm_cell.1} parent=1 // pred_check
      _
    $region23: #{lstm_cell.1} parent=1 // pred_check_branch
      %79 = sbr.rel (0) target = $region25
    $region24: #{lstm_cell.1} parent=1 // pred_region
      _
    $region25: #{lstm_cell.1} parent=1 // pred_fallthru
      _
    // Predicated region
    $region26: #{lstm_cell.1} parent=1 // pred_check
      _
    $region27: #{lstm_cell.1} parent=1 // pred_check_branch
      %81 = sbr.rel (0) target = $region29
    $region28: #{lstm_cell.1} parent=1 // pred_region
      %82 = dma.done [#allocation3], 512
    $region29: #{lstm_cell.1} parent=1 // pred_fallthru
      _
    // Predicated region
    $region30: #{lstm_cell.1} parent=1 // pred_check
      _
    $region31: #{lstm_cell.1} parent=1 // pred_check_branch
      %84 = sbr.rel (0) target = $region33
    $region32: #{lstm_cell.1} parent=1 // pred_region
      %85 = dma.done [#allocation6], 512
    $region33: #{lstm_cell.1} parent=1 // pred_fallthru
      _
    // Predicated region
    $region34: #{lstm_cell.1} parent=1 // pred_check
      _
    $region35: #{lstm_cell.1} parent=1 // pred_check_branch
      %87 = sbr.rel (0) target = $region37
    $region36: #{lstm_cell.1} parent=1 // pred_region
      %88 = dma.done [#allocation6], 512
    $region37: #{lstm_cell.1} parent=1 // pred_fallthru
      _
    // Predicated region
    $region38: #{lstm_cell.1} parent=1 // pred_check
      _
    $region39: #{lstm_cell.1} parent=1 // pred_check_branch
      %90 = sbr.rel (0) target = $region41
    $region40: #{lstm_cell.1} parent=1 // pred_region
      %91 = dma.done [#allocation9], 2048
    $region41: #{lstm_cell.1} parent=1 // pred_fallthru
      _
    // Predicated region
    $region42: #{lstm_cell.1} parent=1 // pred_check
      _
    $region43: #{lstm_cell.1} parent=1 // pred_check_branch
      %93 = sbr.rel (0) target = $region45
    $region44: #{lstm_cell.1} parent=1 // pred_region
      %94 = dma.done [#allocation9], 4096
    $region45: #{lstm_cell.1} parent=1 // pred_fallthru
      _
    %v96 = vld [vmem:[#allocation2] sm:$0xff]
    %v97 = vld [vmem:[#allocation2 + $0x8] sm:$0xff]
    %v98 = vld [vmem:[#allocation2 + $0x10] sm:$0xff]
    %v99 = vld [vmem:[#allocation2 + $0x18] sm:$0xff]
    %v100 = vpack.c.bf16 %v97, %v96
    %v101 = vpack.c.bf16 %v99, %v98
    %v102 = vld [vmem:[#allocation8] sm:$0xff]
    %v103 = vld [vmem:[#allocation8 + $0x8] sm:$0xff]
    %v104 = vld [vmem:[#allocation8 + $0x10] sm:$0xff]
    %v105 = vld [vmem:[#allocation8 + $0x18] sm:$0xff]
    %v106 = vld [vmem:[#allocation8 + $0x20] sm:$0xff]
    %v107 = vld [vmem:[#allocation8 + $0x28] sm:$0xff]
    %v108 = vld [vmem:[#allocation8 + $0x30] sm:$0xff]
    %v109 = vld [vmem:[#allocation8 + $0x38] sm:$0xff]
    %v110 = vld [vmem:[#allocation8 + $0x40] sm:$0xff]
    %v111 = vld [vmem:[#allocation8 + $0x48] sm:$0xff]
    %v112 = vld [vmem:[#allocation8 + $0x50] sm:$0xff]
    %v113 = vld [vmem:[#allocation8 + $0x58] sm:$0xff]
    %v114 = vld [vmem:[#allocation8 + $0x60] sm:$0xff]
    %v115 = vld [vmem:[#allocation8 + $0x68] sm:$0xff]
    %v116 = vld [vmem:[#allocation8 + $0x70] sm:$0xff]
    %v117 = vld [vmem:[#allocation8 + $0x78] sm:$0xff]
    %v118 = vld [vmem:[#allocation5] sm:$0xff]
    %v119 = vld [vmem:[#allocation5 + $0x8] sm:$0xff]
    %v120 = vld [vmem:[#allocation5 + $0x10] sm:$0xff]
    %v121 = vld [vmem:[#allocation5 + $0x18] sm:$0xff]
    %v122 = vpack.c.bf16 %v119, %v118
    %v123 = vpack.c.bf16 %v121, %v120
    %v124 = vld [vmem:[#allocation10] sm:$0xff]
    %v125 = vld [vmem:[#allocation10 + $0x8] sm:$0xff]
    %v126 = vld [vmem:[#allocation10 + $0x10] sm:$0xff]
    %v127 = vld [vmem:[#allocation10 + $0x18] sm:$0xff]
    %v128 = vld [vmem:[#allocation10 + $0x20] sm:$0xff]
    %v129 = vld [vmem:[#allocation10 + $0x28] sm:$0xff]
    %v130 = vld [vmem:[#allocation10 + $0x30] sm:$0xff]
    %v131 = vld [vmem:[#allocation10 + $0x38] sm:$0xff]
    %v132 = vld [vmem:[#allocation10 + $0x40] sm:$0xff]
    %v133 = vld [vmem:[#allocation10 + $0x48] sm:$0xff]
    %v134 = vld [vmem:[#allocation10 + $0x50] sm:$0xff]
    %v135 = vld [vmem:[#allocation10 + $0x58] sm:$0xff]
    %v136 = vld [vmem:[#allocation10 + $0x60] sm:$0xff]
    %v137 = vld [vmem:[#allocation10 + $0x68] sm:$0xff]
    %v138 = vld [vmem:[#allocation10 + $0x70] sm:$0xff]
    %v139 = vld [vmem:[#allocation10 + $0x78] sm:$0xff]
    %v140 = vld [vmem:[#allocation10 + $0x80] sm:$0xff]
    %v141 = vld [vmem:[#allocation10 + $0x88] sm:$0xff]
    %v142 = vld [vmem:[#allocation10 + $0x90] sm:$0xff]
    %v143 = vld [vmem:[#allocation10 + $0x98] sm:$0xff]
    %v144 = vld [vmem:[#allocation10 + $0xa0] sm:$0xff]
    %v145 = vld [vmem:[#allocation10 + $0xa8] sm:$0xff]
    %v146 = vld [vmem:[#allocation10 + $0xb0] sm:$0xff]
    %v147 = vld [vmem:[#allocation10 + $0xb8] sm:$0xff]
    %v148 = vld [vmem:[#allocation10 + $0xc0] sm:$0xff]
    %v149 = vld [vmem:[#allocation10 + $0xc8] sm:$0xff]
    %v150 = vld [vmem:[#allocation10 + $0xd0] sm:$0xff]
    %v151 = vld [vmem:[#allocation10 + $0xd8] sm:$0xff]
    %v152 = vld [vmem:[#allocation10 + $0xe0] sm:$0xff]
    %v153 = vld [vmem:[#allocation10 + $0xe8] sm:$0xff]
    %v154 = vld [vmem:[#allocation10 + $0xf0] sm:$0xff]
    %v155 = vld [vmem:[#allocation10 + $0xf8] sm:$0xff]
    %v188 = vunpack.c.l.b16 %v124
    %v189 = vunpack.c.h.b16 %v124
    %v190 = vunpack.c.l.b16 %v125
    %v191 = vunpack.c.h.b16 %v125
    %v192 = vunpack.c.l.b16 %v126
    %v193 = vunpack.c.h.b16 %v126
    %v194 = vunpack.c.l.b16 %v127
    %v195 = vunpack.c.h.b16 %v127
    %v196 = vunpack.c.l.b16 %v128
    %v197 = vunpack.c.h.b16 %v128
    %v198 = vunpack.c.l.b16 %v129
    %v199 = vunpack.c.h.b16 %v129
    %v200 = vunpack.c.l.b16 %v130
    %v201 = vunpack.c.h.b16 %v130
    %v202 = vunpack.c.l.b16 %v131
    %v203 = vunpack.c.h.b16 %v131
    %v204 = vunpack.c.l.b16 %v132
    %v205 = vunpack.c.h.b16 %v132
    %v206 = vunpack.c.l.b16 %v133
    %v207 = vunpack.c.h.b16 %v133
    %v208 = vunpack.c.l.b16 %v134
    %v209 = vunpack.c.h.b16 %v134
    %v210 = vunpack.c.l.b16 %v135
    %v211 = vunpack.c.h.b16 %v135
    %v212 = vunpack.c.l.b16 %v136
    %v213 = vunpack.c.h.b16 %v136
    %v214 = vunpack.c.l.b16 %v137
    %v215 = vunpack.c.h.b16 %v137
    %v216 = vunpack.c.l.b16 %v138
    %v217 = vunpack.c.h.b16 %v138
    %v218 = vunpack.c.l.b16 %v139
    %v219 = vunpack.c.h.b16 %v139
    %v220 = vunpack.c.l.b16 %v140
    %v221 = vunpack.c.h.b16 %v140
    %v222 = vunpack.c.l.b16 %v141
    %v223 = vunpack.c.h.b16 %v141
    %v224 = vunpack.c.l.b16 %v142
    %v225 = vunpack.c.h.b16 %v142
    %v226 = vunpack.c.l.b16 %v143
    %v227 = vunpack.c.h.b16 %v143
    %v228 = vunpack.c.l.b16 %v144
    %v229 = vunpack.c.h.b16 %v144
    %v230 = vunpack.c.l.b16 %v145
    %v231 = vunpack.c.h.b16 %v145
    %v232 = vunpack.c.l.b16 %v146
    %v233 = vunpack.c.h.b16 %v146
    %v234 = vunpack.c.l.b16 %v147
    %v235 = vunpack.c.h.b16 %v147
    %v236 = vunpack.c.l.b16 %v148
    %v237 = vunpack.c.h.b16 %v148
    %v238 = vunpack.c.l.b16 %v149
    %v239 = vunpack.c.h.b16 %v149
    %v240 = vunpack.c.l.b16 %v150
    %v241 = vunpack.c.h.b16 %v150
    %v242 = vunpack.c.l.b16 %v151
    %v243 = vunpack.c.h.b16 %v151
    %v244 = vunpack.c.l.b16 %v152
    %v245 = vunpack.c.h.b16 %v152
    %v246 = vunpack.c.l.b16 %v153
    %v247 = vunpack.c.h.b16 %v153
    %v248 = vunpack.c.l.b16 %v154
    %v249 = vunpack.c.h.b16 %v154
    %v250 = vunpack.c.l.b16 %v155
    %v251 = vunpack.c.h.b16 %v155
    %v252 = vpack.c.b16 %v192, %v188
    %v253 = vpack.c.b16 %v193, %v189
    %v254 = vpack.c.b16 %v194, %v190
    %v255 = vpack.c.b16 %v195, %v191
    %v256 = vpack.c.b16 %v200, %v196
    %v257 = vpack.c.b16 %v201, %v197
    %v258 = vpack.c.b16 %v202, %v198
    %v259 = vpack.c.b16 %v203, %v199
    %v260 = vpack.c.b16 %v208, %v204
    %v261 = vpack.c.b16 %v209, %v205
    %v262 = vpack.c.b16 %v210, %v206
    %v263 = vpack.c.b16 %v211, %v207
    %v264 = vpack.c.b16 %v216, %v212
    %v265 = vpack.c.b16 %v217, %v213
    %v266 = vpack.c.b16 %v218, %v214
    %v267 = vpack.c.b16 %v219, %v215
    %v268 = vpack.c.b16 %v224, %v220
    %v269 = vpack.c.b16 %v225, %v221
    %v270 = vpack.c.b16 %v226, %v222
    %v271 = vpack.c.b16 %v227, %v223
    %v272 = vpack.c.b16 %v232, %v228
    %v273 = vpack.c.b16 %v233, %v229
    %v274 = vpack.c.b16 %v234, %v230
    %v275 = vpack.c.b16 %v235, %v231
    %v276 = vpack.c.b16 %v240, %v236
    %v277 = vpack.c.b16 %v241, %v237
    %v278 = vpack.c.b16 %v242, %v238
    %v279 = vpack.c.b16 %v243, %v239
    %v280 = vpack.c.b16 %v248, %v244
    %v281 = vpack.c.b16 %v249, %v245
    %v282 = vpack.c.b16 %v250, %v246
    %v283 = vpack.c.b16 %v251, %v247
    %316 = vmatprep.subr.bf16.mxu0 %v253
    %317 = vmatpush1.bf16.msra.mxu0 %v252
    %318 = vmatprep.subr.bf16.mxu0 %v257
    %319 = vmatpush1.bf16.msra.mxu0 %v256
    %320 = vmatprep.subr.bf16.mxu0 %v261
    %321 = vmatpush1.bf16.msra.mxu0 %v260
    %322 = vmatprep.subr.bf16.mxu0 %v265
    %323 = vmatpush1.bf16.msra.mxu0 %v264
    %324 = vmatprep.subr.bf16.mxu0 %v269
    %325 = vmatpush1.bf16.msra.mxu0 %v268
    %326 = vmatprep.subr.bf16.mxu0 %v273
    %327 = vmatpush1.bf16.msra.mxu0 %v272
    %328 = vmatprep.subr.bf16.mxu0 %v277
    %329 = vmatpush1.bf16.msra.mxu0 %v276
    %330 = vmatprep.subr.bf16.mxu0 %v281
    %331 = vmatpush1.bf16.msra.mxu0 %v280
    %332 = vmatprep.subr.bf16.mxu0 0
    %333 = vmatpush1.bf16.msra.mxu0 0
    %334 = vmatprep.subr.bf16.mxu0 0
    %335 = vmatpush1.bf16.msra.mxu0 0
    %336 = vmatprep.subr.bf16.mxu0 0
    %337 = vmatpush1.bf16.msra.mxu0 0
    %338 = vmatprep.subr.bf16.mxu0 0
    %339 = vmatpush1.bf16.msra.mxu0 0
    %340 = vmatprep.subr.bf16.mxu0 0
    %341 = vmatpush1.bf16.msra.mxu0 0
    %342 = vmatprep.subr.bf16.mxu0 0
    %343 = vmatpush1.bf16.msra.mxu0 0
    %344 = vmatprep.subr.bf16.mxu0 0
    %345 = vmatpush1.bf16.msra.mxu0 0
    %346 = vmatprep.subr.bf16.mxu0 0
    %347 = vmatpush1.bf16.msra.mxu0 0
    %348 = vmatprep.mubr.bf16.mxu0 0
    %349 = vmatmul.mubr.bf16.gmra.mrb[0].mxu0 %v122
    %v350 = vpop.f32.mrb[0].mxu0
    %v351 = vadd.f32 0.0, %v350
    %v352 = vpop.f32.mrb[0].mxu0
    %v353 = vadd.f32 0.0, %v352
    %v354 = vpop.f32.mrb[0].mxu0
    %v355 = vadd.f32 0.0, %v354
    %v356 = vpop.f32.mrb[0].mxu0
    %v357 = vadd.f32 0.0, %v356
    %358 = vmatprep.mubr.bf16.mxu0 0
    %359 = vmatmul.mubr.bf16.gmra.mrb[0].mxu0 %v123
    %v360 = vpop.f32.mrb[0].mxu0
    %v361 = vadd.f32 0.0, %v360
    %v362 = vpop.f32.mrb[0].mxu0
    %v363 = vadd.f32 0.0, %v362
    %v364 = vpop.f32.mrb[0].mxu0
    %v365 = vadd.f32 0.0, %v364
    %v366 = vpop.f32.mrb[0].mxu0
    %v367 = vadd.f32 0.0, %v366
    %368 = vdwg.mxu0
    %369 = vmatprep.subr.bf16.mxu0 %v255
    %370 = vmatpush1.bf16.msra.mxu0 %v254
    %371 = vmatprep.subr.bf16.mxu0 %v259
    %372 = vmatpush1.bf16.msra.mxu0 %v258
    %373 = vmatprep.subr.bf16.mxu0 %v263
    %374 = vmatpush1.bf16.msra.mxu0 %v262
    %375 = vmatprep.subr.bf16.mxu0 %v267
    %376 = vmatpush1.bf16.msra.mxu0 %v266
    %377 = vmatprep.subr.bf16.mxu0 %v271
    %378 = vmatpush1.bf16.msra.mxu0 %v270
    %379 = vmatprep.subr.bf16.mxu0 %v275
    %380 = vmatpush1.bf16.msra.mxu0 %v274
    %381 = vmatprep.subr.bf16.mxu0 %v279
    %382 = vmatpush1.bf16.msra.mxu0 %v278
    %383 = vmatprep.subr.bf16.mxu0 %v283
    %384 = vmatpush1.bf16.msra.mxu0 %v282
    %385 = vmatprep.subr.bf16.mxu0 0
    %386 = vmatpush1.bf16.msra.mxu0 0
    %387 = vmatprep.subr.bf16.mxu0 0
    %388 = vmatpush1.bf16.msra.mxu0 0
    %389 = vmatprep.subr.bf16.mxu0 0
    %390 = vmatpush1.bf16.msra.mxu0 0
    %391 = vmatprep.subr.bf16.mxu0 0
    %392 = vmatpush1.bf16.msra.mxu0 0
    %393 = vmatprep.subr.bf16.mxu0 0
    %394 = vmatpush1.bf16.msra.mxu0 0
    %395 = vmatprep.subr.bf16.mxu0 0
    %396 = vmatpush1.bf16.msra.mxu0 0
    %397 = vmatprep.subr.bf16.mxu0 0
    %398 = vmatpush1.bf16.msra.mxu0 0
    %399 = vmatprep.subr.bf16.mxu0 0
    %400 = vmatpush1.bf16.msra.mxu0 0
    %401 = vmatprep.mubr.bf16.mxu0 0
    %402 = vmatmul.mubr.bf16.gmra.mrb[0].mxu0 %v122
    %v403 = vpop.f32.mrb[0].mxu0
    %v404 = vadd.f32 0.0, %v403
    %v405 = vpop.f32.mrb[0].mxu0
    %v406 = vadd.f32 0.0, %v405
    %v407 = vpop.f32.mrb[0].mxu0
    %v408 = vadd.f32 0.0, %v407
    %v409 = vpop.f32.mrb[0].mxu0
    %v410 = vadd.f32 0.0, %v409
    %411 = vmatprep.mubr.bf16.mxu0 0
    %412 = vmatmul.mubr.bf16.gmra.mrb[0].mxu0 %v123
    %v413 = vpop.f32.mrb[0].mxu0
    %v414 = vadd.f32 0.0, %v413
    %v415 = vpop.f32.mrb[0].mxu0
    %v416 = vadd.f32 0.0, %v415
    %v417 = vpop.f32.mrb[0].mxu0
    %v418 = vadd.f32 0.0, %v417
    %v419 = vpop.f32.mrb[0].mxu0
    %v420 = vadd.f32 0.0, %v419
    %421 = vdwg.mxu0
    %v438 = vunpack.c.l.b16 %v102
    %v439 = vunpack.c.h.b16 %v102
    %v440 = vunpack.c.l.b16 %v103
    %v441 = vunpack.c.h.b16 %v103
    %v442 = vunpack.c.l.b16 %v104
    %v443 = vunpack.c.h.b16 %v104
    %v444 = vunpack.c.l.b16 %v105
    %v445 = vunpack.c.h.b16 %v105
    %v446 = vunpack.c.l.b16 %v106
    %v447 = vunpack.c.h.b16 %v106
    %v448 = vunpack.c.l.b16 %v107
    %v449 = vunpack.c.h.b16 %v107
    %v450 = vunpack.c.l.b16 %v108
    %v451 = vunpack.c.h.b16 %v108
    %v452 = vunpack.c.l.b16 %v109
    %v453 = vunpack.c.h.b16 %v109
    %v454 = vunpack.c.l.b16 %v110
    %v455 = vunpack.c.h.b16 %v110
    %v456 = vunpack.c.l.b16 %v111
    %v457 = vunpack.c.h.b16 %v111
    %v458 = vunpack.c.l.b16 %v112
    %v459 = vunpack.c.h.b16 %v112
    %v460 = vunpack.c.l.b16 %v113
    %v461 = vunpack.c.h.b16 %v113
    %v462 = vunpack.c.l.b16 %v114
    %v463 = vunpack.c.h.b16 %v114
    %v464 = vunpack.c.l.b16 %v115
    %v465 = vunpack.c.h.b16 %v115
    %v466 = vunpack.c.l.b16 %v116
    %v467 = vunpack.c.h.b16 %v116
    %v468 = vunpack.c.l.b16 %v117
    %v469 = vunpack.c.h.b16 %v117
    %v470 = vpack.c.b16 %v442, %v438
    %v471 = vpack.c.b16 %v443, %v439
    %v472 = vpack.c.b16 %v444, %v440
    %v473 = vpack.c.b16 %v445, %v441
    %v474 = vpack.c.b16 %v450, %v446
    %v475 = vpack.c.b16 %v451, %v447
    %v476 = vpack.c.b16 %v452, %v448
    %v477 = vpack.c.b16 %v453, %v449
    %v478 = vpack.c.b16 %v458, %v454
    %v479 = vpack.c.b16 %v459, %v455
    %v480 = vpack.c.b16 %v460, %v456
    %v481 = vpack.c.b16 %v461, %v457
    %v482 = vpack.c.b16 %v466, %v462
    %v483 = vpack.c.b16 %v467, %v463
    %v484 = vpack.c.b16 %v468, %v464
    %v485 = vpack.c.b16 %v469, %v465
    %vm502 = vcmask 523264
    %v504 = vsel %vm502, %v100, 0
    %v507 = vsel %vm502, %v101, 0
    %509 = vmatprep.subr.bf16.mxu0 %v471
    %510 = vmatpush1.bf16.msra.mxu0 %v470
    %511 = vmatprep.subr.bf16.mxu0 %v475
    %512 = vmatpush1.bf16.msra.mxu0 %v474
    %513 = vmatprep.subr.bf16.mxu0 %v479
    %514 = vmatpush1.bf16.msra.mxu0 %v478
    %515 = vmatprep.subr.bf16.mxu0 %v483
    %516 = vmatpush1.bf16.msra.mxu0 %v482
    %517 = vmatprep.subr.bf16.mxu0 0
    %518 = vmatpush1.bf16.msra.mxu0 0
    %519 = vmatprep.subr.bf16.mxu0 0
    %520 = vmatpush1.bf16.msra.mxu0 0
    %521 = vmatprep.subr.bf16.mxu0 0
    %522 = vmatpush1.bf16.msra.mxu0 0
    %523 = vmatprep.subr.bf16.mxu0 0
    %524 = vmatpush1.bf16.msra.mxu0 0
    %525 = vmatprep.subr.bf16.mxu0 0
    %526 = vmatpush1.bf16.msra.mxu0 0
    %527 = vmatprep.subr.bf16.mxu0 0
    %528 = vmatpush1.bf16.msra.mxu0 0
    %529 = vmatprep.subr.bf16.mxu0 0
    %530 = vmatpush1.bf16.msra.mxu0 0
    %531 = vmatprep.subr.bf16.mxu0 0
    %532 = vmatpush1.bf16.msra.mxu0 0
    %533 = vmatprep.subr.bf16.mxu0 0
    %534 = vmatpush1.bf16.msra.mxu0 0
    %535 = vmatprep.subr.bf16.mxu0 0
    %536 = vmatpush1.bf16.msra.mxu0 0
    %537 = vmatprep.subr.bf16.mxu0 0
    %538 = vmatpush1.bf16.msra.mxu0 0
    %539 = vmatprep.subr.bf16.mxu0 0
    %540 = vmatpush1.bf16.msra.mxu0 0
    %541 = vmatprep.mubr.bf16.mxu0 0
    %542 = vmatmul.mubr.bf16.gmra.mrb[0].mxu0 %v504
    %v543 = vpop.f32.mrb[0].mxu0
    %v544 = vadd.f32 %v351, %v543
    %v545 = vpop.f32.mrb[0].mxu0
    %v546 = vadd.f32 %v353, %v545
    %v547 = vpop.f32.mrb[0].mxu0
    %v548 = vadd.f32 %v355, %v547
    %v549 = vpop.f32.mrb[0].mxu0
    %v550 = vadd.f32 %v357, %v549
    %551 = vmatprep.mubr.bf16.mxu0 0
    %552 = vmatmul.mubr.bf16.gmra.mrb[0].mxu0 %v507
    %v553 = vpop.f32.mrb[0].mxu0
    %v554 = vadd.f32 %v361, %v553
    %v555 = vpop.f32.mrb[0].mxu0
    %v556 = vadd.f32 %v363, %v555
    %v557 = vpop.f32.mrb[0].mxu0
    %v558 = vadd.f32 %v365, %v557
    %v559 = vpop.f32.mrb[0].mxu0
    %v560 = vadd.f32 %v367, %v559
    %561 = vdwg.mxu0
    %562 = vmatprep.subr.bf16.mxu0 %v473
    %563 = vmatpush1.bf16.msra.mxu0 %v472
    %564 = vmatprep.subr.bf16.mxu0 %v477
    %565 = vmatpush1.bf16.msra.mxu0 %v476
    %566 = vmatprep.subr.bf16.mxu0 %v481
    %567 = vmatpush1.bf16.msra.mxu0 %v480
    %568 = vmatprep.subr.bf16.mxu0 %v485
    %569 = vmatpush1.bf16.msra.mxu0 %v484
    %570 = vmatprep.subr.bf16.mxu0 0
    %571 = vmatpush1.bf16.msra.mxu0 0
    %572 = vmatprep.subr.bf16.mxu0 0
    %573 = vmatpush1.bf16.msra.mxu0 0
    %574 = vmatprep.subr.bf16.mxu0 0
    %575 = vmatpush1.bf16.msra.mxu0 0
    %576 = vmatprep.subr.bf16.mxu0 0
    %577 = vmatpush1.bf16.msra.mxu0 0
    %578 = vmatprep.subr.bf16.mxu0 0
    %579 = vmatpush1.bf16.msra.mxu0 0
    %580 = vmatprep.subr.bf16.mxu0 0
    %581 = vmatpush1.bf16.msra.mxu0 0
    %582 = vmatprep.subr.bf16.mxu0 0
    %583 = vmatpush1.bf16.msra.mxu0 0
    %584 = vmatprep.subr.bf16.mxu0 0
    %585 = vmatpush1.bf16.msra.mxu0 0
    %586 = vmatprep.subr.bf16.mxu0 0
    %587 = vmatpush1.bf16.msra.mxu0 0
    %588 = vmatprep.subr.bf16.mxu0 0
    %589 = vmatpush1.bf16.msra.mxu0 0
    %590 = vmatprep.subr.bf16.mxu0 0
    %591 = vmatpush1.bf16.msra.mxu0 0
    %592 = vmatprep.subr.bf16.mxu0 0
    %593 = vmatpush1.bf16.msra.mxu0 0
    %594 = vmatprep.mubr.bf16.mxu0 0
    %595 = vmatmul.mubr.bf16.gmra.mrb[0].mxu0 %v504
    %v596 = vpop.f32.mrb[0].mxu0
    %v597 = vadd.f32 %v404, %v596
    %v598 = vpop.f32.mrb[0].mxu0
    %v599 = vadd.f32 %v406, %v598
    %v600 = vpop.f32.mrb[0].mxu0
    %v601 = vadd.f32 %v408, %v600
    %v602 = vpop.f32.mrb[0].mxu0
    %v603 = vadd.f32 %v410, %v602
    %604 = vmatprep.mubr.bf16.mxu0 0
    %605 = vmatmul.mubr.bf16.gmra.mrb[0].mxu0 %v507
    %v606 = vpop.f32.mrb[0].mxu0
    %v607 = vadd.f32 %v414, %v606
    %v608 = vpop.f32.mrb[0].mxu0
    %v609 = vadd.f32 %v416, %v608
    %v610 = vpop.f32.mrb[0].mxu0
    %v611 = vadd.f32 %v418, %v610
    %v612 = vpop.f32.mrb[0].mxu0
    %v613 = vadd.f32 %v420, %v612
    %614 = vdwg.mxu0
    %v615 = vld [vmem:[%s5] sm:$0xf]
    %v616 = vunpack.c.l.bf16 %v615
    %v618 = vlaneseq
    %v619 = vshrl.u32 %v618, 7
    %v620 = vsub.s32 0, %v619
    %v621 = vrot.slane %v616, %v620
    %v622 = vlaneseq
    %v623 = vshrl.u32 %v622, 7
    %v624 = vsub.s32 2, %v623
    %v625 = vrot.slane %v616, %v624
    %v626 = vlaneseq
    %v627 = vshrl.u32 %v626, 7
    %v628 = vsub.s32 4, %v627
    %v629 = vrot.slane %v616, %v628
    %v630 = vlaneseq
    %v631 = vshrl.u32 %v630, 7
    %v632 = vsub.s32 6, %v631
    %v633 = vrot.slane %v616, %v632
    %v638 = vlaneseq
    %v639 = vshrl.u32 %v638, 7
    %v640 = vsub.s32 0, %v639
    %v641 = vrot.slane %v621, %v640
    %v642 = vlaneseq
    %v643 = vshrl.u32 %v642, 7
    %v644 = vsub.s32 0, %v643
    %v645 = vrot.slane %v625, %v644
    %v646 = vlaneseq
    %v647 = vshrl.u32 %v646, 7
    %v648 = vsub.s32 0, %v647
    %v649 = vrot.slane %v629, %v648
    %v650 = vlaneseq
    %v651 = vshrl.u32 %v650, 7
    %v652 = vsub.s32 0, %v651
    %v653 = vrot.slane %v633, %v652
    %v654 = vadd.f32 %v544, %v641
    %v655 = vadd.f32 %v546, %v645
    %v656 = vadd.f32 %v597, %v649
    %v657 = vadd.f32 %v599, %v653
    %v658 = vadd.f32 %v548, %v641
    %v659 = vadd.f32 %v550, %v645
    %v660 = vadd.f32 %v601, %v649
    %v661 = vadd.f32 %v603, %v653
    %v662 = vadd.f32 %v554, %v641
    %v663 = vadd.f32 %v556, %v645
    %v664 = vadd.f32 %v607, %v649
    %v665 = vadd.f32 %v609, %v653
    %v666 = vadd.f32 %v558, %v641
    %v667 = vadd.f32 %v560, %v645
    %v668 = vadd.f32 %v611, %v649
    %v669 = vadd.f32 %v613, %v653
    %v670 = vld [vmem:[#allocation7] sm:$0xff]
    %v671 = vld [vmem:[#allocation7 + $0x8] sm:$0xff]
    %v672 = vld [vmem:[#allocation7 + $0x10] sm:$0xff]
    %v673 = vld [vmem:[#allocation7 + $0x18] sm:$0xff]
    %v674 = vxor.u32 %v654, 2147483648
    %v675 = vxor.u32 %v658, 2147483648
    %v676 = vxor.u32 %v662, 2147483648
    %v677 = vxor.u32 %v666, 2147483648
    %v678 = vmul.f32 %v674, 1.442695
    %v679 = vpow.pop %v678
    %v680 = vmul.f32 %v675, 1.442695
    %v681 = vpow.pop %v680
    %v682 = vmul.f32 %v676, 1.442695
    %v683 = vpow.pop %v682
    %v684 = vmul.f32 %v677, 1.442695
    %v685 = vpow.pop %v684
    %v686 = vadd.f32 %v679, 1.0
    %v687 = vadd.f32 %v681, 1.0
    %v688 = vadd.f32 %v683, 1.0
    %v689 = vadd.f32 %v685, 1.0
    %v690 = vrcp.pop %v686
    %v691 = vmul.f32 1.0, %v690
    %v692 = vrcp.pop %v687
    %v693 = vmul.f32 1.0, %v692
    %v694 = vrcp.pop %v688
    %v695 = vmul.f32 1.0, %v694
    %v696 = vrcp.pop %v689
    %v697 = vmul.f32 1.0, %v696
    %v698 = vxor.u32 %v655, 2147483648
    %v699 = vxor.u32 %v659, 2147483648
    %v700 = vxor.u32 %v663, 2147483648
    %v701 = vxor.u32 %v667, 2147483648
    %v702 = vmul.f32 %v698, 1.442695
    %v703 = vpow.pop %v702
    %v704 = vmul.f32 %v699, 1.442695
    %v705 = vpow.pop %v704
    %v706 = vmul.f32 %v700, 1.442695
    %v707 = vpow.pop %v706
    %v708 = vmul.f32 %v701, 1.442695
    %v709 = vpow.pop %v708
    %v710 = vadd.f32 %v703, 1.0
    %v711 = vadd.f32 %v705, 1.0
    %v712 = vadd.f32 %v707, 1.0
    %v713 = vadd.f32 %v709, 1.0
    %v714 = vrcp.pop %v710
    %v715 = vmul.f32 1.0, %v714
    %v716 = vrcp.pop %v711
    %v717 = vmul.f32 1.0, %v716
    %v718 = vrcp.pop %v712
    %v719 = vmul.f32 1.0, %v718
    %v720 = vrcp.pop %v713
    %v721 = vmul.f32 1.0, %v720
    %v722 = vxor.u32 %v656, 2147483648
    %v723 = vxor.u32 %v660, 2147483648
    %v724 = vxor.u32 %v664, 2147483648
    %v725 = vxor.u32 %v668, 2147483648
    %v726 = vmul.f32 %v722, 1.442695
    %v727 = vpow.pop %v726
    %v728 = vmul.f32 %v723, 1.442695
    %v729 = vpow.pop %v728
    %v730 = vmul.f32 %v724, 1.442695
    %v731 = vpow.pop %v730
    %v732 = vmul.f32 %v725, 1.442695
    %v733 = vpow.pop %v732
    %v734 = vadd.f32 %v727, 1.0
    %v735 = vadd.f32 %v729, 1.0
    %v736 = vadd.f32 %v731, 1.0
    %v737 = vadd.f32 %v733, 1.0
    %v738 = vrcp.pop %v734
    %v739 = vmul.f32 1.0, %v738
    %v740 = vrcp.pop %v735
    %v741 = vmul.f32 1.0, %v740
    %v742 = vrcp.pop %v736
    %v743 = vmul.f32 1.0, %v742
    %v744 = vrcp.pop %v737
    %v745 = vmul.f32 1.0, %v744
    %v746 = vtanh.pop %v657
    %v747 = vtanh.pop %v661
    %v748 = vtanh.pop %v665
    %v749 = vtanh.pop %v669
    %v750 = vmul.f32 %v691, %v670
    %v751 = vmul.f32 %v693, %v671
    %v752 = vmul.f32 %v695, %v672
    %v753 = vmul.f32 %v697, %v673
    %v754 = vmul.f32 %v715, %v746
    %v755 = vmul.f32 %v717, %v747
    %v756 = vmul.f32 %v719, %v748
    %v757 = vmul.f32 %v721, %v749
    %v758 = vadd.f32 %v750, %v754
    %v759 = vadd.f32 %v751, %v755
    %v760 = vadd.f32 %v752, %v756
    %v761 = vadd.f32 %v753, %v757
    %v762 = vtanh.pop %v758
    %v763 = vtanh.pop %v759
    %v764 = vtanh.pop %v760
    %v765 = vtanh.pop %v761
    %v766 = vmul.f32 %v739, %v762
    %v767 = vmul.f32 %v741, %v763
    %v768 = vmul.f32 %v743, %v764
    %v769 = vmul.f32 %v745, %v765
    %770 = vst [vmem:[#allocation11] sm:$0xff] %v766
    %771 = vst [vmem:[#allocation11 + $0x8] sm:$0xff] %v767
    %772 = vst [vmem:[#allocation11 + $0x10] sm:$0xff] %v768
    %773 = vst [vmem:[#allocation11 + $0x18] sm:$0xff] %v769
    %774 = vst [vmem:[#allocation12] sm:$0xff] %v758
    %775 = vst [vmem:[#allocation12 + $0x8] sm:$0xff] %v759
    %776 = vst [vmem:[#allocation12 + $0x10] sm:$0xff] %v760
    %777 = vst [vmem:[#allocation12 + $0x18] sm:$0xff] %v761
    // Predicated region
    $region46: #{lstm_cell.1} parent=1 // pred_check
      _
    $region47: #{lstm_cell.1} parent=1 // pred_check_branch
      %779 = sbr.rel (0) target = $region49
    $region48: #{lstm_cell.1} parent=1 // pred_region
      %s781 = ssub.s32 512, 512
      %782 = vsyncadd [#allocation4], %s781
      %s783 = sshll.u32 [#allocation11], 4
      %s784 = int_to_ptr.vmem [resolvable:$true] %s783
      %789 = dma.vmem_to_hbm [thread:$0]  %s784, 512, %s6, [#allocation4], 128, 128, 8
    $region49: #{lstm_cell.1} parent=1 // pred_fallthru
      _
    // Predicated region
    $region50: #{lstm_cell.1} parent=1 // pred_check
      _
    $region51: #{lstm_cell.1} parent=1 // pred_check_branch
      %791 = sbr.rel (0) target = $region53
    $region52: #{lstm_cell.1} parent=1 // pred_region
      %s793 = ssub.s32 512, 512
      %794 = vsyncadd [#allocation13], %s793
      %s795 = sshll.u32 [#allocation12], 4
      %s796 = int_to_ptr.vmem [resolvable:$true] %s795
      %801 = dma.vmem_to_hbm [thread:$0]  %s796, 512, %s7, [#allocation13], 128, 128, 8
    $region53: #{lstm_cell.1} parent=1 // pred_fallthru
      _
    // Predicated region
    $region54: #{lstm_cell.1} parent=1 // pred_check
      _
    $region55: #{lstm_cell.1} parent=1 // pred_check_branch
      %803 = sbr.rel (0) target = $region57
    $region56: #{lstm_cell.1} parent=1 // pred_region
      %804 = dma.done [#allocation4], 512
    $region57: #{lstm_cell.1} parent=1 // pred_fallthru
      _
    // Predicated region
    $region58: #{lstm_cell.1} parent=1 // pred_check
      _
    $region59: #{lstm_cell.1} parent=1 // pred_check_branch
      %806 = sbr.rel (0) target = $region61
    $region60: #{lstm_cell.1} parent=1 // pred_region
      %807 = dma.done [#allocation13], 512
    $region61: #{lstm_cell.1} parent=1 // pred_fallthru
      _
    %808 = vsyncpa [#allocation3], 1
    %809 = vsyncpa [#allocation6], 1
    %810 = vsyncpa [#allocation9], 1
    %811 = vsyncpa [#allocation4], 1
    %812 = vsyncpa [#allocation13], 1

</llo_original>
